<compile_context>
chip_gen: v6e
topology: v6e:2x2x1
jax: 0.10.0
libtpu: 0.0.40
codegen_flags: <defaults>
</compile_context>

<pallas_src>
import jax
import jax.numpy as jnp
from jax.experimental import pallas as pl
from jax.experimental.pallas import tpu as pltpu


def _round_up(x, m):
    return (x + m - 1) // m * m


def _bottle_kernel(x_ref, w1_ref, w2_ref, o_ref, h_ref):
    # x_ref:  (tm, inplanes)         compute dtype
    # w1_ref: (inplanes, hidden_pad) compute dtype
    # w2_ref: (hidden_pad, outplanes) compute dtype
    # o_ref:  (tm, outplanes)        output dtype
    # h_ref:  (tm, hidden_pad)       compute-dtype VMEM scratch
    h = jnp.dot(x_ref[...], w1_ref[...], preferred_element_type=jnp.float32)
    h_ref[...] = jnp.maximum(h, 0.0).astype(h_ref.dtype)        # ReLU 1
    o = jnp.dot(h_ref[...], w2_ref[...], preferred_element_type=jnp.float32)
    o_ref[...] = jnp.maximum(o, 0.0).astype(o_ref.dtype)        # ReLU 2


def bottole_project(features, high2low, low2high, *, tm=512, compute_dtype=None):
    """relu(relu(features @ high2low) @ low2high) via a fused Pallas TPU kernel.

    compute_dtype=jnp.bfloat16 is recommended for production (mem-bound kernel,
    f32 accumulation kept); leave None to match the f32 PyTorch reference.
    """
    inplanes, hidden_dim = high2low.shape
    hidden_dim2, outplanes = low2high.shape
    assert hidden_dim == hidden_dim2
    assert features.shape[-1] == inplanes

    lead_shape = features.shape[:-1]
    out_dtype = features.dtype
    x2d = features.reshape(-1, inplanes)
    M = x2d.shape[0]

    # Optional reduced-precision activations/weights (accumulation stays f32).
    if compute_dtype is not None:
        x2d = x2d.astype(compute_dtype)
        high2low = high2low.astype(compute_dtype)
        low2high = low2high.astype(compute_dtype)
    cdt = x2d.dtype
    c_item = jnp.dtype(cdt).itemsize
    o_item = jnp.dtype(out_dtype).itemsize

    # Zero-pad the hidden axis to a lane multiple (exact); output stays unpadded.
    hidden_pad = _round_up(hidden_dim, 128)
    if hidden_pad != hidden_dim:
        w1 = jnp.pad(high2low, ((0, 0), (0, hidden_pad - hidden_dim)))
        w2 = jnp.pad(low2high, ((0, hidden_pad - hidden_dim), (0, 0)))
    else:
        w1, w2 = high2low, low2high

    # Generation-aware VMEM budget (v7x: 64 MiB physical; v5e/v6e: 128 MiB).
    try:
        vmem_cap = int(pltpu.get_tpu_info().vmem_capacity_bytes)
    except Exception:
        vmem_cap = 64 << 20          # conservative (v7x) fallback
    vmem_budget = (vmem_cap * 3) // 4

    def footprint(tm_):
        return (2 * tm_ * inplanes * c_item          # x (double-buffered)
                + 2 * tm_ * outplanes * o_item       # out (double-buffered)
                + tm_ * hidden_pad * c_item          # h scratch
                + 2 * inplanes * hidden_pad * c_item # w1
                + 2 * hidden_pad * outplanes * c_item)  # w2

    # Row-tile selection.
    if M <= 128:
        # Tiny inputs: don't force a 128-row tile of mostly-zero padding.
        tm = max(8, _round_up(M, 8))
    else:
        tm = _round_up(max(128, int(tm)), 128)
        tm = min(tm, _round_up(M, 128))
        while tm > 128 and footprint(tm) > vmem_budget:
            tm -= 128
    grid_m = pl.cdiv(M, tm)

    # v7x megacore: if the whole problem fits one tile, split it in two when
    # that adds no extra row padding, so both TensorCores get a grid step.
    if grid_m == 1 and tm >= 256 and tm % 256 == 0:
        tm //= 2
        grid_m = pl.cdiv(M, tm)

    M_pad = grid_m * tm
    if M_pad != M:
        # Only materialise the pad copy when the last tile is actually ragged.
        x2d = jnp.pad(x2d, ((0, M_pad - M), (0, 0)))

    vmem_limit = int(min(vmem_cap, max(footprint(tm) + (4 << 20), 32 << 20)))

    flops = 2 * M_pad * (inplanes * hidden_pad + hidden_pad * outplanes)
    bytes_accessed = (x2d.size * x2d.dtype.itemsize
                      + w1.size * w1.dtype.itemsize
                      + w2.size * w2.dtype.itemsize
                      + M_pad * outplanes * o_item)

    out2d = pl.pallas_call(
        _bottle_kernel,
        out_shape=jax.ShapeDtypeStruct((M_pad, outplanes), out_dtype),
        grid_spec=pltpu.PrefetchScalarGridSpec(
            num_scalar_prefetch=0,
            grid=(grid_m,),
            in_specs=[
                pl.BlockSpec((tm, inplanes), lambda i: (i, 0)),
                # Weights: constant index_map -> resident across the grid.
                pl.BlockSpec((inplanes, hidden_pad), lambda i: (0, 0)),
                pl.BlockSpec((hidden_pad, outplanes), lambda i: (0, 0)),
            ],
            out_specs=pl.BlockSpec((tm, outplanes), lambda i: (i, 0)),
            scratch_shapes=[pltpu.VMEM((tm, hidden_pad), cdt)],
        ),
        compiler_params=pltpu.CompilerParams(
            dimension_semantics=("parallel",),
            vmem_limit_bytes=vmem_limit),
        cost_estimate=pl.CostEstimate(
            flops=flops, transcendentals=0, bytes_accessed=bytes_accessed),
    )(x2d, w1, w2)

    if M_pad != M:
        out2d = out2d[:M]
    return out2d.reshape(*lead_shape, outplanes)


def init_params(key, inplanes, outplanes, hidden_dim=50, dtype=jnp.float32):
    """Deterministic kaiming_normal_-style init (fan_in = dim 1, gain=sqrt(2))."""
    k1, k2 = jax.random.split(key)
    std1 = (2.0 / hidden_dim) ** 0.5   # fan_in of (inplanes, hidden_dim) is dim 1
    std2 = (2.0 / outplanes) ** 0.5    # fan_in of (hidden_dim, outplanes) is dim 1
    high2low = (jax.random.normal(k1, (inplanes, hidden_dim)) * std1).astype(dtype)
    low2high = (jax.random.normal(k2, (hidden_dim, outplanes)) * std2).astype(dtype)
    return high2low, low2high


if __name__ == "__main__":
    key = jax.random.PRNGKey(0)
    k_x, k_p, k_x2 = jax.random.split(key, 3)

    inplanes, outplanes, hidden_dim = 32, 32, 50
    high2low, low2high = init_params(k_p, inplanes, outplanes, hidden_dim)

    # --- small 3D input: tiny-M path (tm = round_up(M, 8)) ------------------
    batch, seq = 2, 8
    features = jax.random.normal(k_x, (batch, seq, inplanes), dtype=jnp.float32)
    ref = jnp.maximum(jnp.maximum(features @ high2low, 0.0) @ low2high, 0.0)

    out = jax.block_until_ready(bottole_project(features, high2low, low2high))
    assert out.shape == (batch, seq, outplanes)
    assert jnp.allclose(out, ref, atol=1e-5, rtol=1e-5)

    # bf16 compute path (recommended production setting): loose tolerance.
    out_bf16 = jax.block_until_ready(
        bottole_project(features, high2low, low2high,
                        compute_dtype=jnp.bfloat16))
    assert out_bf16.shape == (batch, seq, outplanes)
    assert jnp.allclose(out_bf16.astype(jnp.float32), ref, atol=1e-1, rtol=1e-1)

    # --- larger 2D slab: multi-step grid + ragged last tile path ------------
    feats2 = jax.random.normal(k_x2, (640, inplanes), dtype=jnp.float32)
    ref2 = jnp.maximum(jnp.maximum(feats2 @ high2low, 0.0) @ low2high, 0.0)
    out2 = jax.block_until_ready(bottole_project(feats2, high2low, low2high))
    assert out2.shape == (640, outplanes)
    assert jnp.allclose(out2, ref2, atol=1e-5, rtol=1e-5)

    print("KERNEL_OK")
</pallas_src>

<mosaic_0001>
module attributes {stable_mosaic.version = 11 : i64} {
  func.func @_bottle_kernel(%arg0: i32, %arg1: memref<16x32xf32, #tpu.memory_space<vmem>>, %arg2: memref<32x128xf32, #tpu.memory_space<vmem>>, %arg3: memref<128x32xf32, #tpu.memory_space<vmem>>, %arg4: memref<16x32xf32, #tpu.memory_space<vmem>>, %arg5: memref<16x128xf32, #tpu.memory_space<vmem>>) attributes {dimension_semantics = [#tpu.dimension_semantics<parallel>], iteration_bounds = array<i64: 1>, scalar_prefetch = 0 : i64, scratch_operands = 1 : i64, tpu.core_type = #tpu.core_type<tc>, window_params = [{transform_indices = @transform_0, window_bounds = array<i64: 16, 32>}, {pipeline_mode = #tpu.pipeline_mode<synchronous>, transform_indices = @transform_1, window_bounds = array<i64: 32, 128>}, {pipeline_mode = #tpu.pipeline_mode<synchronous>, transform_indices = @transform_2, window_bounds = array<i64: 128, 32>}, {transform_indices = @transform_3, window_bounds = array<i64: 16, 32>}]} {
    %c0 = arith.constant 0 : index
    %c0_0 = arith.constant 0 : index
    %0 = vector.load %arg1[%c0, %c0_0] : memref<16x32xf32, #tpu.memory_space<vmem>>, vector<16x32xf32>
    %c0_1 = arith.constant 0 : index
    %c0_2 = arith.constant 0 : index
    %1 = vector.load %arg2[%c0_1, %c0_2] : memref<32x128xf32, #tpu.memory_space<vmem>>, vector<32x128xf32>
    %cst = arith.constant dense<0.000000e+00> : vector<16x128xf32>
    %2 = tpu.matmul %0, %1, %cst {dimension_numbers = #tpu.dot_dimension_numbers<[1], [0], [0], [1], [0, 0, 1, 1], [], []>} : vector<16x32xf32>, vector<32x128xf32>, vector<16x128xf32> -> vector<16x128xf32>
    %cst_3 = arith.constant 0.000000e+00 : f32
    %3 = vector.broadcast %cst_3 : f32 to vector<16x128xf32>
    %4 = arith.maximumf %2, %3 : vector<16x128xf32>
    %c0_4 = arith.constant 0 : index
    %c0_5 = arith.constant 0 : index
    %5 = vector.load %arg5[%c0_4, %c0_5] : memref<16x128xf32, #tpu.memory_space<vmem>>, vector<16x128xf32>
    tpu.vector_store %arg5[%c0_4, %c0_5], %4 {strides = array<i32>} : memref<16x128xf32, #tpu.memory_space<vmem>>, vector<16x128xf32>,
    %c0_6 = arith.constant 0 : index
    %c0_7 = arith.constant 0 : index
    %6 = vector.load %arg5[%c0_6, %c0_7] : memref<16x128xf32, #tpu.memory_space<vmem>>, vector<16x128xf32>
    %c0_8 = arith.constant 0 : index
    %c0_9 = arith.constant 0 : index
    %7 = vector.load %arg3[%c0_8, %c0_9] : memref<128x32xf32, #tpu.memory_space<vmem>>, vector<128x32xf32>
    %cst_10 = arith.constant dense<0.000000e+00> : vector<16x32xf32>
    %8 = tpu.matmul %6, %7, %cst_10 {dimension_numbers = #tpu.dot_dimension_numbers<[1], [0], [0], [1], [0, 0, 1, 1], [], []>} : vector<16x128xf32>, vector<128x32xf32>, vector<16x32xf32> -> vector<16x32xf32>
    %cst_11 = arith.constant 0.000000e+00 : f32
    %9 = vector.broadcast %cst_11 : f32 to vector<16x32xf32>
    %10 = arith.maximumf %8, %9 : vector<16x32xf32>
    %c0_12 = arith.constant 0 : index
    %c0_13 = arith.constant 0 : index
    %11 = vector.load %arg4[%c0_12, %c0_13] : memref<16x32xf32, #tpu.memory_space<vmem>>, vector<16x32xf32>
    tpu.vector_store %arg4[%c0_12, %c0_13], %10 {strides = array<i32>} : memref<16x32xf32, #tpu.memory_space<vmem>>, vector<16x32xf32>,
    return
  }
  func.func @transform_0(%arg0: i32) -> (i32, i32) {
    %c0_i32 = arith.constant 0 : i32
    %c0_i32_0 = arith.constant 0 : i32
    return %arg0, %c0_i32 : i32, i32
  }
  func.func @transform_1(%arg0: i32) -> (i32, i32) {
    %c0_i32 = arith.constant 0 : i32
    %c0_i32_0 = arith.constant 0 : i32
    %c0_i32_1 = arith.constant 0 : i32
    return %c0_i32, %c0_i32_0 : i32, i32
  }
  func.func @transform_2(%arg0: i32) -> (i32, i32) {
    %c0_i32 = arith.constant 0 : i32
    %c0_i32_0 = arith.constant 0 : i32
    %c0_i32_1 = arith.constant 0 : i32
    return %c0_i32, %c0_i32_0 : i32, i32
  }
  func.func @transform_3(%arg0: i32) -> (i32, i32) {
    %c0_i32 = arith.constant 0 : i32
    %c0_i32_0 = arith.constant 0 : i32
    return %arg0, %c0_i32 : i32, i32
  }
}

</mosaic_0001>

<llo_original>
// kernel: tpu_custom_call.1
$region0: #{tpu_custom_call.1}
  #allocation0 [shape = 'u32[]', space=smem, size = 0x4, offset = 0x4, fixed_abs, tag = 'smem constant byte address 0x4 - core index']
  #allocation1 [shape = 'u32[144,128]{1,0:T(1,128)}', space=vmem, size = 0x12000, scoped, tag = 'internal scratch']
  #allocation2 [shape = 'f32[16,128]{1,0:T(8,128)}', space=vmem, size = 0x2000, scoped, tag = 'scratch operand']
  %s0 = inlined_call_operand.vmem [shape: f32[16,32], index: 0, kind: input, shape index: {}]
  %s1 = inlined_call_operand.vmem [shape: f32[32,128], index: 1, kind: input, shape index: {}]
  %s2 = inlined_call_operand.vmem [shape: f32[128,32], index: 2, kind: input, shape index: {}]
  %s3 = inlined_call_operand.hbm [shape: f32[16,32], index: 3, kind: output, shape index: {}]
  %s4 = sld [smem:[#allocation0]]
  $region22: #{tpu_custom_call.1} parent=0
    _
  %s6 = ssub.s32 1, %s4
  %s7 = scalar_select 0, %s6, %s4
  $region1: #{tpu_custom_call.1} parent=0
    #allocation3 [shape = 'u8[8192]{0}', space=vmem, size = 0x2000, scoped, tag = 'output window, operand 0, single buffered']
    #allocation4 [shape = 's32[1]{0}', space=sflag, size = 0x4, scoped, tag = 'scoped memory for tpu_custom_call.1']
    %8 = vsyncpa [#allocation4], 0
    // Predicated region
    $region2: #{tpu_custom_call.1} parent=1 // pred_check
      _
    $region3: #{tpu_custom_call.1} parent=1 // pred_check_branch
      %10 = sbr.rel (0) target = $region5
    $region4: #{tpu_custom_call.1} parent=1 // pred_region
      _
    $region5: #{tpu_custom_call.1} parent=1 // pred_fallthru
      _
    // Predicated region
    $region6: #{tpu_custom_call.1} parent=1 // pred_check
      _
    $region7: #{tpu_custom_call.1} parent=1 // pred_check_branch
      %12 = sbr.rel (0) target = $region9
    $region8: #{tpu_custom_call.1} parent=1 // pred_region
      _
    $region9: #{tpu_custom_call.1} parent=1 // pred_fallthru
      _
    // Predicated region
    $region10: #{tpu_custom_call.1} parent=1 // pred_check
      _
    $region11: #{tpu_custom_call.1} parent=1 // pred_check_branch
      %14 = sbr.rel (0) target = $region13
    $region12: #{tpu_custom_call.1} parent=1 // pred_region
      _
    $region13: #{tpu_custom_call.1} parent=1 // pred_fallthru
      _
    %v15 = vld [vmem:[%s0] sm:$0xff]
    %v16 = vld [vmem:[%s0 + $0x8] sm:$0xff]
    %v17 = vld [vmem:[%s1] sm:$0xff]
    %v18 = vld [vmem:[%s1 + $0x8] sm:$0xff]
    %v19 = vld [vmem:[%s1 + $0x10] sm:$0xff]
    %v20 = vld [vmem:[%s1 + $0x18] sm:$0xff]
    %vm21 = vcmask 261120
    %v23 = vsel %vm21, %v15, 0
    %v26 = vsel %vm21, %v16, 0
    %28 = vmatprep.subr.mxu0 0.0
    %29 = vmatpush1.msra.mxu0 0.0
    %30 = vmatprep.subr.mxu0 0.0
    %31 = vmatpush1.msra.mxu0 0.0
    %32 = vmatprep.subr.mxu0 0.0
    %33 = vmatpush1.msra.mxu0 0.0
    %34 = vmatprep.subr.mxu0 0.0
    %35 = vmatpush1.msra.mxu0 0.0
    %36 = vmatprep.subr.mxu0 0.0
    %37 = vmatpush1.msra.mxu0 0.0
    %38 = vmatprep.subr.mxu0 0.0
    %39 = vmatpush1.msra.mxu0 0.0
    %40 = vmatprep.subr.mxu0 0.0
    %41 = vmatpush1.msra.mxu0 0.0
    %42 = vmatprep.subr.mxu0 0.0
    %43 = vmatpush1.msra.mxu0 0.0
    %44 = vmatprep.subr.mxu0 0.0
    %45 = vmatpush1.msra.mxu0 0.0
    %46 = vmatprep.subr.mxu0 0.0
    %47 = vmatpush1.msra.mxu0 0.0
    %48 = vmatprep.subr.mxu0 0.0
    %49 = vmatpush1.msra.mxu0 0.0
    %50 = vmatprep.subr.mxu0 0.0
    %51 = vmatpush1.msra.mxu0 0.0
    %52 = vmatprep.subr.mxu0 0.0
    %53 = vmatpush1.msra.mxu0 %v20
    %54 = vmatprep.subr.mxu0 0.0
    %55 = vmatpush1.msra.mxu0 %v19
    %56 = vmatprep.subr.mxu0 0.0
    %57 = vmatpush1.msra.mxu0 %v18
    %58 = vmatprep.subr.mxu0 0.0
    %59 = vmatpush1.msra.mxu0 %v17
    %60 = vmatprep.subr.mxu0 0.0
    %61 = vmatpush2.msra.mxu0 0.0
    %62 = vmatprep.subr.mxu0 0.0
    %63 = vmatpush2.msra.mxu0 0.0
    %64 = vmatprep.subr.mxu0 0.0
    %65 = vmatpush2.msra.mxu0 0.0
    %66 = vmatprep.subr.mxu0 0.0
    %67 = vmatpush2.msra.mxu0 0.0
    %68 = vmatprep.subr.mxu0 0.0
    %69 = vmatpush2.msra.mxu0 0.0
    %70 = vmatprep.subr.mxu0 0.0
    %71 = vmatpush2.msra.mxu0 0.0
    %72 = vmatprep.subr.mxu0 0.0
    %73 = vmatpush2.msra.mxu0 0.0
    %74 = vmatprep.subr.mxu0 0.0
    %75 = vmatpush2.msra.mxu0 0.0
    %76 = vmatprep.subr.mxu0 0.0
    %77 = vmatpush2.msra.mxu0 0.0
    %78 = vmatprep.subr.mxu0 0.0
    %79 = vmatpush2.msra.mxu0 0.0
    %80 = vmatprep.subr.mxu0 0.0
    %81 = vmatpush2.msra.mxu0 0.0
    %82 = vmatprep.subr.mxu0 0.0
    %83 = vmatpush2.msra.mxu0 0.0
    %84 = vmatprep.subr.mxu0 0.0
    %85 = vmatpush2.msra.mxu0 0.0
    %86 = vmatprep.subr.mxu0 0.0
    %87 = vmatpush2.msra.mxu0 0.0
    %88 = vmatprep.subr.mxu0 0.0
    %89 = vmatpush2.msra.mxu0 0.0
    %90 = vmatprep.subr.mxu0 0.0
    %91 = vmatpush2.msra.mxu0 0.0
    %92 = vmatprep.mubr.f32.mxu0 0.0
    %93 = vmatmul.mubr.f32.gmra.mxu0 %v23
    %v94 = vpop.f32.mrf.mxu0
    %v95 = vadd.f32 0.0, %v94
    %v96 = vpop.f32.mrf.mxu0
    %97 = vmatprep.mubr.f32.mxu0 0.0
    %98 = vmatmul.mubr.f32.gmra.mxu0 %v26
    %v99 = vpop.f32.mrf.mxu0
    %v100 = vadd.f32 0.0, %v99
    %v101 = vpop.f32.mrf.mxu0
    %102 = vdwg.mxu0
    %v103 = vmax.f32 %v95, 0.0
    %v104 = vmax.f32 %v100, 0.0
    %105 = vst [vmem:[#allocation2] sm:$0xff] %v103
    %106 = vst [vmem:[#allocation2 + $0x8] sm:$0xff] %v104
    %v107 = vld [vmem:[#allocation2] sm:$0xff]
    %v108 = vld [vmem:[#allocation2 + $0x8] sm:$0xff]
    %v109 = vld [vmem:[%s2] sm:$0xff]
    %v110 = vld [vmem:[%s2 + $0x8] sm:$0xff]
    %v111 = vld [vmem:[%s2 + $0x10] sm:$0xff]
    %v112 = vld [vmem:[%s2 + $0x18] sm:$0xff]
    %v113 = vld [vmem:[%s2 + $0x20] sm:$0xff]
    %v114 = vld [vmem:[%s2 + $0x28] sm:$0xff]
    %v115 = vld [vmem:[%s2 + $0x30] sm:$0xff]
    %v116 = vld [vmem:[%s2 + $0x38] sm:$0xff]
    %v117 = vld [vmem:[%s2 + $0x40] sm:$0xff]
    %v118 = vld [vmem:[%s2 + $0x48] sm:$0xff]
    %v119 = vld [vmem:[%s2 + $0x50] sm:$0xff]
    %v120 = vld [vmem:[%s2 + $0x58] sm:$0xff]
    %v121 = vld [vmem:[%s2 + $0x60] sm:$0xff]
    %v122 = vld [vmem:[%s2 + $0x68] sm:$0xff]
    %v123 = vld [vmem:[%s2 + $0x70] sm:$0xff]
    %v124 = vld [vmem:[%s2 + $0x78] sm:$0xff]
    %125 = vmatprep.subr.mxu0 0.0
    %126 = vmatpush1.msra.mxu0 %v124
    %127 = vmatprep.subr.mxu0 0.0
    %128 = vmatpush1.msra.mxu0 %v123
    %129 = vmatprep.subr.mxu0 0.0
    %130 = vmatpush1.msra.mxu0 %v122
    %131 = vmatprep.subr.mxu0 0.0
    %132 = vmatpush1.msra.mxu0 %v121
    %133 = vmatprep.subr.mxu0 0.0
    %134 = vmatpush1.msra.mxu0 %v120
    %135 = vmatprep.subr.mxu0 0.0
    %136 = vmatpush1.msra.mxu0 %v119
    %137 = vmatprep.subr.mxu0 0.0
    %138 = vmatpush1.msra.mxu0 %v118
    %139 = vmatprep.subr.mxu0 0.0
    %140 = vmatpush1.msra.mxu0 %v117
    %141 = vmatprep.subr.mxu0 0.0
    %142 = vmatpush1.msra.mxu0 %v116
    %143 = vmatprep.subr.mxu0 0.0
    %144 = vmatpush1.msra.mxu0 %v115
    %145 = vmatprep.subr.mxu0 0.0
    %146 = vmatpush1.msra.mxu0 %v114
    %147 = vmatprep.subr.mxu0 0.0
    %148 = vmatpush1.msra.mxu0 %v113
    %149 = vmatprep.subr.mxu0 0.0
    %150 = vmatpush1.msra.mxu0 %v112
    %151 = vmatprep.subr.mxu0 0.0
    %152 = vmatpush1.msra.mxu0 %v111
    %153 = vmatprep.subr.mxu0 0.0
    %154 = vmatpush1.msra.mxu0 %v110
    %155 = vmatprep.subr.mxu0 0.0
    %156 = vmatpush1.msra.mxu0 %v109
    %157 = vmatprep.subr.mxu0 0.0
    %158 = vmatpush2.msra.mxu0 0.0
    %159 = vmatprep.subr.mxu0 0.0
    %160 = vmatpush2.msra.mxu0 0.0
    %161 = vmatprep.subr.mxu0 0.0
    %162 = vmatpush2.msra.mxu0 0.0
    %163 = vmatprep.subr.mxu0 0.0
    %164 = vmatpush2.msra.mxu0 0.0
    %165 = vmatprep.subr.mxu0 0.0
    %166 = vmatpush2.msra.mxu0 0.0
    %167 = vmatprep.subr.mxu0 0.0
    %168 = vmatpush2.msra.mxu0 0.0
    %169 = vmatprep.subr.mxu0 0.0
    %170 = vmatpush2.msra.mxu0 0.0
    %171 = vmatprep.subr.mxu0 0.0
    %172 = vmatpush2.msra.mxu0 0.0
    %173 = vmatprep.subr.mxu0 0.0
    %174 = vmatpush2.msra.mxu0 0.0
    %175 = vmatprep.subr.mxu0 0.0
    %176 = vmatpush2.msra.mxu0 0.0
    %177 = vmatprep.subr.mxu0 0.0
    %178 = vmatpush2.msra.mxu0 0.0
    %179 = vmatprep.subr.mxu0 0.0
    %180 = vmatpush2.msra.mxu0 0.0
    %181 = vmatprep.subr.mxu0 0.0
    %182 = vmatpush2.msra.mxu0 0.0
    %183 = vmatprep.subr.mxu0 0.0
    %184 = vmatpush2.msra.mxu0 0.0
    %185 = vmatprep.subr.mxu0 0.0
    %186 = vmatpush2.msra.mxu0 0.0
    %187 = vmatprep.subr.mxu0 0.0
    %188 = vmatpush2.msra.mxu0 0.0
    %189 = vmatprep.mubr.f32.mxu0 0.0
    %190 = vmatmul.mubr.f32.gmra.mxu0 %v107
    %v191 = vpop.f32.mrf.mxu0
    %v192 = vadd.f32 0.0, %v191
    %v193 = vpop.f32.mrf.mxu0
    %194 = vmatprep.mubr.f32.mxu0 0.0
    %195 = vmatmul.mubr.f32.gmra.mxu0 %v108
    %v196 = vpop.f32.mrf.mxu0
    %v197 = vadd.f32 0.0, %v196
    %v198 = vpop.f32.mrf.mxu0
    %199 = vdwg.mxu0
    %v200 = vmax.f32 %v192, 0.0
    %v201 = vmax.f32 %v197, 0.0
    %202 = vst.msk [vmem:[#allocation3] sm:$0xff] %vm21, %v200
    %203 = vst.msk [vmem:[#allocation3 + $0x8] sm:$0xff] %vm21, %v201
    // Predicated region
    $region14: #{tpu_custom_call.1} parent=1 // pred_check
      _
    $region15: #{tpu_custom_call.1} parent=1 // pred_check_branch
      %205 = sbr.rel (0) target = $region17
    $region16: #{tpu_custom_call.1} parent=1 // pred_region
      %s207 = ssub.s32 256, 256
      %208 = vsyncadd [#allocation4], %s207
      %s209 = sshll.u32 [#allocation3], 4
      %s210 = int_to_ptr.vmem [resolvable:$true] %s209
      %215 = dma.vmem_to_hbm [thread:$0]  %s210, 256, %s3, [#allocation4], 128, 128, 8
    $region17: #{tpu_custom_call.1} parent=1 // pred_fallthru
      _
    // Predicated region
    $region18: #{tpu_custom_call.1} parent=1 // pred_check
      _
    $region19: #{tpu_custom_call.1} parent=1 // pred_check_branch
      %217 = sbr.rel (0) target = $region21
    $region20: #{tpu_custom_call.1} parent=1 // pred_region
      %218 = dma.done [#allocation4], 256
    $region21: #{tpu_custom_call.1} parent=1 // pred_fallthru
      _
    %219 = vsyncpa [#allocation4], 1

</llo_original>
